<compile_context>
chip_gen: v6e
topology: v6e:2x2x1
jax: 0.10.0
libtpu: 0.0.40
codegen_flags: <defaults>
</compile_context>

<pallas_src>
import functools

import numpy as np
import jax
import jax.numpy as jnp
from jax.experimental import pallas as pl
from jax.experimental.pallas import tpu as pltpu

_EPS = 1e-6  # torch.nn.PairwiseDistance default eps (added to the difference)

# Distance-column layout produced by the kernel:
#   0: d(ar,pr) 1: d(ar,pl) 2: d(ar,nr) 3: d(ar,nl)
#   4: d(al,pr) 5: d(al,pl) 6: d(al,nr) 7: d(al,nl)
# L1..L8 pairings (matches the torch forward):
_DP_COLS = np.array([0, 0, 1, 1, 4, 4, 5, 5], dtype=np.int32)
_DN_COLS = np.array([2, 3, 2, 3, 6, 7, 6, 7], dtype=np.int32)

_MAX_TILE_D = 32768  # 6 inputs x 2 buffers x 128 KiB = 1.5 MiB VMEM -> fits v5e/v6e/v7x


def _cdiv(a, b):
    return -(-a // b)


def _choose_tiling(d):
    """Pick a D tile (multiple of 8*128) and padded D that it divides evenly."""
    k = _cdiv(d, _MAX_TILE_D)
    tile_d = _cdiv(_cdiv(d, k), 1024) * 1024
    d_pad = tile_d * k
    return tile_d, d_pad


# ----------------------------------------------------------------------------
# Device-side [B, B] cross-modal distance matrix used only for triplet selection
# (so the host never sees the full feature tensors).
# ----------------------------------------------------------------------------
def _cross_distance_matrix(fe1, fe2):
    # ||x - y + eps||^2 = ||x||^2 + ||y||^2 - 2 x.y + 2 eps (sum x - sum y) + D eps^2
    d = fe1.shape[1]
    x2 = jnp.sum(fe1 * fe1, axis=1, keepdims=True)        # (B, 1)
    y2 = jnp.sum(fe2 * fe2, axis=1, keepdims=True).T      # (1, B)
    xy = fe1 @ fe2.T                                       # (B, B)
    sx = jnp.sum(fe1, axis=1, keepdims=True)               # (B, 1)
    sy = jnp.sum(fe2, axis=1, keepdims=True).T             # (1, B)
    sq = x2 + y2 - 2.0 * xy + 2.0 * _EPS * (sx - sy) + d * (_EPS * _EPS)
    return jnp.sqrt(jnp.maximum(sq, 0.0))


# ----------------------------------------------------------------------------
# Host-side triplet selection (mirrors triplet_loss.triplet_selector, 'hard').
# Takes the precomputed [B, B] cross-modal distance matrix instead of features.
# ----------------------------------------------------------------------------
def triplet_selector(pos_mat, neg_mat, cross_dist, margin,
                     selector_fn="hard", rng=None):
    if rng is None:
        rng = np.random.default_rng(0)
    triplets = []
    pos_idx_x, pos_idx_y = np.where(pos_mat == 1)
    neg_idx_x, neg_idx_y = np.where(neg_mat == 1)
    for a_idx in range(pos_mat.shape[0] // 2):
        p_idx = pos_idx_y[(pos_idx_x == a_idx) & (pos_idx_y != a_idx)][0]
        n_indices = neg_idx_y[(neg_idx_x == a_idx) & (neg_idx_y != a_idx)]
        if len(n_indices) == 0:
            continue
        if selector_fn == "hard":
            pos_dist = cross_dist[a_idx, p_idx]
            neg_dist = cross_dist[a_idx, n_indices]
            dist = pos_dist - neg_dist + margin
            possible = np.where(dist > 0.0)[0]
            if len(possible) == 0:
                n_idx = rng.choice(n_indices)
            else:
                n_idx = rng.choice(n_indices[possible])
        elif selector_fn == "random":
            n_idx = rng.choice(n_indices)
        else:
            raise NotImplementedError("Selector function not implemented")
        triplets.append([int(a_idx), int(p_idx), int(n_idx)])
    return np.asarray(triplets, dtype=np.int32).reshape(-1, 3)


# ----------------------------------------------------------------------------
# Pallas kernel: for triplet t, accumulate the 8 pairwise sum-of-squares over
# D tiles (VPU-only steady state), sqrt at the last D tile.
# ----------------------------------------------------------------------------
def _pairwise_dist_kernel(a_idx_ref, p_idx_ref, n_idx_ref,          # scalar prefetch (unused in body)
                          ar_ref, al_ref, pr_ref, plr_ref, nr_ref, nl_ref,
                          dist_ref, acc_ref,
                          *, tile_rows, pad_correction):
    k = pl.program_id(1)

    @pl.when(k == 0)
    def _init():
        acc_ref[...] = jnp.zeros_like(acc_ref)

    # eps folded into the two anchors once (2 adds) instead of per pair (8 adds);
    # (x + eps) - y == x - y + eps (torch PairwiseDistance semantics).
    ar = ar_ref[0] + _EPS       # (tile_rows, 128) dense (sublane, lane) tiles
    al = al_ref[0] + _EPS
    pr = pr_ref[0]
    po = plr_ref[0]
    nr = nr_ref[0]
    nl = nl_ref[0]

    pairs = ((ar, pr), (ar, po), (ar, nr), (ar, nl),
             (al, pr), (al, po), (al, nr), (al, nl))
    for i, (x, y) in enumerate(pairs):
        diff = x - y
        sq = diff * diff
        if tile_rows == 8:
            partial = sq                                            # already (8, 128)
        else:
            # Reduce across vreg "planes" only (pure VPU adds, no XLU in steady state).
            partial = jnp.sum(sq.reshape(tile_rows // 8, 8, 128), axis=0)   # (8, 128)
        acc_ref[i] += partial

    @pl.when(k == pl.num_programs(1) - 1)
    def _finish():
        # Single cross-lane/sublane reduction per triplet, sqrt after full-D sum.
        ssq = jnp.sum(jnp.sum(acc_ref[...], axis=-1), axis=-1, keepdims=True)  # (8, 1)
        # Zero-padded feature elements each contribute exactly eps^2 to every pair
        # (anchor pad = eps, other pad = 0); subtract that constant analytically
        # instead of masking every tile in the steady state.
        ssq = jnp.maximum(ssq - pad_correction, 0.0)
        dist_ref[...] = jnp.sqrt(ssq).reshape(1, 8, 1)


def _pallas_pairwise_distances(rf3, lf3, a_idx, p_idx, n_idx, d_total, tile_d):
    """Returns the (T, 8) pairwise L2 distances for all triplets."""
    t_count = int(a_idx.shape[0])
    _, r_pad, _ = rf3.shape
    d_pad = r_pad * 128
    tile_rows = tile_d // 128
    k_steps = d_pad // tile_d
    pad_correction = float(d_pad - d_total) * _EPS * _EPS

    def a_map(t, k, a, p, n): return (a[t], k, 0)
    def p_map(t, k, a, p, n): return (p[t], k, 0)
    def n_map(t, k, a, p, n): return (n[t], k, 0)

    blk = (1, tile_rows, 128)
    in_specs = [pl.BlockSpec(blk, a_map), pl.BlockSpec(blk, a_map),
                pl.BlockSpec(blk, p_map), pl.BlockSpec(blk, p_map),
                pl.BlockSpec(blk, n_map), pl.BlockSpec(blk, n_map)]
    out_specs = pl.BlockSpec((1, 8, 1), lambda t, k, a, p, n: (t, 0, 0))

    grid_spec = pltpu.PrefetchScalarGridSpec(
        num_scalar_prefetch=3,
        grid=(t_count, k_steps),
        in_specs=in_specs,
        out_specs=out_specs,
        scratch_shapes=[pltpu.VMEM((8, 8, 128), jnp.float32)],
    )

    kernel = functools.partial(
        _pairwise_dist_kernel,
        tile_rows=tile_rows,
        pad_correction=pad_correction)

    cost = pl.CostEstimate(
        flops=int(8 * 3 * t_count * d_pad),
        transcendentals=int(8 * t_count),
        bytes_accessed=int(6 * t_count * d_pad * 4 + t_count * 8 * 4 + 3 * t_count * 4))

    out = pl.pallas_call(
        kernel,
        out_shape=jax.ShapeDtypeStruct((t_count, 8, 1), jnp.float32),
        grid_spec=grid_spec,
        compiler_params=pltpu.CompilerParams(
            dimension_semantics=("parallel", "arbitrary"),
            vmem_limit_bytes=32 * 1024 * 1024),
        cost_estimate=cost,
    )(a_idx, p_idx, n_idx, rf3, lf3, rf3, lf3, rf3, lf3)
    return out[:, :, 0]   # (T, 8)


# ----------------------------------------------------------------------------
# Forward pass (mirrors triplet_loss.forward).
# ----------------------------------------------------------------------------
def triplet_loss_forward(pos_mat, neg_mat, radar_features, lidar_features,
                         margin=1.0, triplet_selector_fn="hard", seed=0):
    B = radar_features.shape[0]
    rf2 = jnp.reshape(radar_features, (B, -1)).astype(jnp.float32)
    lf2 = jnp.reshape(lidar_features, (B, -1)).astype(jnp.float32)

    # Only a [B, B] matrix crosses the device->host boundary for selection.
    cross_dist = np.asarray(_cross_distance_matrix(rf2, lf2))
    triplets = triplet_selector(np.asarray(pos_mat), np.asarray(neg_mat),
                                cross_dist, margin,
                                selector_fn=triplet_selector_fn,
                                rng=np.random.default_rng(seed))
    if len(triplets) == 0:
        return 0.0, None, None

    a_idx = jnp.asarray(triplets[:, 0], dtype=jnp.int32)
    p_idx = jnp.asarray(triplets[:, 1], dtype=jnp.int32)
    n_idx = jnp.asarray(triplets[:, 2], dtype=jnp.int32)

    D = rf2.shape[1]
    tile_d, d_pad = _choose_tiling(D)
    pad = d_pad - D
    if pad:
        rf2 = jnp.pad(rf2, ((0, 0), (0, pad)))
        lf2 = jnp.pad(lf2, ((0, 0), (0, pad)))
    rf3 = rf2.reshape(B, d_pad // 128, 128)
    lf3 = lf2.reshape(B, d_pad // 128, 128)

    dists = _pallas_pairwise_distances(rf3, lf3, a_idx, p_idx, n_idx, D, tile_d)

    # Tiny hinge/mean/sum epilogue over (T, 8) scalars (plain JAX).
    dp = dists[:, _DP_COLS]
    dn = dists[:, _DN_COLS]
    loss = jnp.sum(jnp.mean(jnp.maximum(margin + dp - dn, 0.0), axis=0))
    return loss, radar_features, lidar_features


# ----------------------------------------------------------------------------
# Pure-numpy reference (torch semantics) for correctness checking.
# ----------------------------------------------------------------------------
def _np_reference(triplets, rf, lf, margin):
    a, p, n = triplets[:, 0], triplets[:, 1], triplets[:, 2]

    def pdist(x, y):
        return np.linalg.norm(x - y + _EPS, axis=1)

    def tl(anc, pos, neg):
        return np.mean(np.maximum(margin + pdist(anc, pos) - pdist(anc, neg), 0.0))

    total = 0.0
    for anc in (rf[a], lf[a]):
        for pos in (rf[p], lf[p]):
            for neg in (rf[n], lf[n]):
                total += tl(anc, pos, neg)
    return total


if __name__ == "__main__":
    margin = 1.0
    B, C, H, W = 4, 4, 16, 16

    key = jax.random.PRNGKey(0)
    k1, k2 = jax.random.split(key)
    radar_features = jax.random.normal(k1, (B, C, H, W), dtype=jnp.float32)
    lidar_features = jax.random.normal(k2, (B, C, H, W), dtype=jnp.float32)

    # Deterministic positive/negative adjacency matrices (pairs 0<->1, 2<->3).
    pos_mat = np.array([[1, 1, 0, 0],
                        [1, 1, 0, 0],
                        [0, 0, 1, 1],
                        [0, 0, 1, 1]], dtype=np.int32)
    neg_mat = 1 - pos_mat

    loss, rf_out, lf_out = triplet_loss_forward(
        pos_mat, neg_mat, radar_features, lidar_features,
        margin=margin, triplet_selector_fn="hard", seed=0)
    loss = jax.block_until_ready(loss)

    # Reference: same triplets (same selector path + seed), numpy math on f32 features.
    rf2 = jnp.reshape(radar_features, (B, -1)).astype(jnp.float32)
    lf2 = jnp.reshape(lidar_features, (B, -1)).astype(jnp.float32)
    cross = np.asarray(_cross_distance_matrix(rf2, lf2))
    trips = triplet_selector(pos_mat, neg_mat, cross, margin, "hard",
                             np.random.default_rng(0))
    ref = _np_reference(trips, np.asarray(rf2), np.asarray(lf2), margin)
    assert np.allclose(float(loss), ref, rtol=1e-4, atol=1e-4), (float(loss), ref)

    print("KERNEL_OK")
</pallas_src>

<mosaic_0001>
module attributes {stable_mosaic.version = 11 : i64} {
  func.func @_pairwise_dist_kernel(%arg0: i32, %arg1: i32, %arg2: memref<2xi32, #tpu.memory_space<smem>>, %arg3: memref<2xi32, #tpu.memory_space<smem>>, %arg4: memref<2xi32, #tpu.memory_space<smem>>, %arg5: memref<1x8x128xf32, #tpu.memory_space<vmem>>, %arg6: memref<1x8x128xf32, #tpu.memory_space<vmem>>, %arg7: memref<1x8x128xf32, #tpu.memory_space<vmem>>, %arg8: memref<1x8x128xf32, #tpu.memory_space<vmem>>, %arg9: memref<1x8x128xf32, #tpu.memory_space<vmem>>, %arg10: memref<1x8x128xf32, #tpu.memory_space<vmem>>, %arg11: memref<1x8x1xf32, #tpu.memory_space<vmem>>, %arg12: memref<8x8x128xf32, #tpu.memory_space<vmem>>) attributes {dimension_semantics = [#tpu.dimension_semantics<parallel>, #tpu.dimension_semantics<arbitrary>], iteration_bounds = array<i64: 2, 1>, scalar_prefetch = 3 : i64, scratch_operands = 1 : i64, tpu.core_type = #tpu.core_type<tc>, window_params = [{transform_indices = @transform_0, window_bounds = array<i64: 1, 8, 128>}, {transform_indices = @transform_1, window_bounds = array<i64: 1, 8, 128>}, {transform_indices = @transform_2, window_bounds = array<i64: 1, 8, 128>}, {transform_indices = @transform_3, window_bounds = array<i64: 1, 8, 128>}, {transform_indices = @transform_4, window_bounds = array<i64: 1, 8, 128>}, {transform_indices = @transform_5, window_bounds = array<i64: 1, 8, 128>}, {transform_indices = @transform_6, window_bounds = array<i64: 1, 8, 1>}]} {
    %c0_i32 = arith.constant 0 : i32
    %0 = arith.cmpi eq, %arg1, %c0_i32 : i32
    %1 = arith.extui %0 : i1 to i32
    %c0_i32_0 = arith.constant 0 : i32
    %2 = arith.cmpi ne, %1, %c0_i32_0 : i32
    scf.if %2 {
      %cst_62 = arith.constant 0.000000e+00 : f32
      %86 = vector.broadcast %cst_62 : f32 to vector<8x8x128xf32>
      %c0_63 = arith.constant 0 : index
      %c0_64 = arith.constant 0 : index
      %c0_65 = arith.constant 0 : index
      %87 = vector.load %arg12[%c0_63, %c0_64, %c0_65] : memref<8x8x128xf32, #tpu.memory_space<vmem>>, vector<8x8x128xf32>
      tpu.vector_store %arg12[%c0_63, %c0_64, %c0_65], %86 {strides = array<i32>} : memref<8x8x128xf32, #tpu.memory_space<vmem>>, vector<8x8x128xf32>,
    } else {
    }
    %c0 = arith.constant 0 : index
    %c0_1 = arith.constant 0 : index
    %c0_2 = arith.constant 0 : index
    %3 = vector.load %arg5[%c0, %c0_1, %c0_2] : memref<1x8x128xf32, #tpu.memory_space<vmem>>, vector<1x8x128xf32>
    %4 = vector.shape_cast %3 : vector<1x8x128xf32> to vector<8x128xf32>
    %cst = arith.constant 9.99999997E-7 : f32
    %5 = vector.broadcast %cst : f32 to vector<8x128xf32>
    %6 = arith.addf %4, %5 : vector<8x128xf32>
    %c0_3 = arith.constant 0 : index
    %c0_4 = arith.constant 0 : index
    %c0_5 = arith.constant 0 : index
    %7 = vector.load %arg6[%c0_3, %c0_4, %c0_5] : memref<1x8x128xf32, #tpu.memory_space<vmem>>, vector<1x8x128xf32>
    %8 = vector.shape_cast %7 : vector<1x8x128xf32> to vector<8x128xf32>
    %cst_6 = arith.constant 9.99999997E-7 : f32
    %9 = vector.broadcast %cst_6 : f32 to vector<8x128xf32>
    %10 = arith.addf %8, %9 : vector<8x128xf32>
    %c0_7 = arith.constant 0 : index
    %c0_8 = arith.constant 0 : index
    %c0_9 = arith.constant 0 : index
    %11 = vector.load %arg7[%c0_7, %c0_8, %c0_9] : memref<1x8x128xf32, #tpu.memory_space<vmem>>, vector<1x8x128xf32>
    %12 = vector.shape_cast %11 : vector<1x8x128xf32> to vector<8x128xf32>
    %c0_10 = arith.constant 0 : index
    %c0_11 = arith.constant 0 : index
    %c0_12 = arith.constant 0 : index
    %13 = vector.load %arg8[%c0_10, %c0_11, %c0_12] : memref<1x8x128xf32, #tpu.memory_space<vmem>>, vector<1x8x128xf32>
    %14 = vector.shape_cast %13 : vector<1x8x128xf32> to vector<8x128xf32>
    %c0_13 = arith.constant 0 : index
    %c0_14 = arith.constant 0 : index
    %c0_15 = arith.constant 0 : index
    %15 = vector.load %arg9[%c0_13, %c0_14, %c0_15] : memref<1x8x128xf32, #tpu.memory_space<vmem>>, vector<1x8x128xf32>
    %16 = vector.shape_cast %15 : vector<1x8x128xf32> to vector<8x128xf32>
    %c0_16 = arith.constant 0 : index
    %c0_17 = arith.constant 0 : index
    %c0_18 = arith.constant 0 : index
    %17 = vector.load %arg10[%c0_16, %c0_17, %c0_18] : memref<1x8x128xf32, #tpu.memory_space<vmem>>, vector<1x8x128xf32>
    %18 = vector.shape_cast %17 : vector<1x8x128xf32> to vector<8x128xf32>
    %19 = arith.subf %6, %12 : vector<8x128xf32>
    %20 = arith.mulf %19, %19 : vector<8x128xf32>
    %c0_19 = arith.constant 0 : index
    %c0_20 = arith.constant 0 : index
    %c0_21 = arith.constant 0 : index
    %21 = vector.load %arg12[%c0_19, %c0_20, %c0_21] : memref<8x8x128xf32, #tpu.memory_space<vmem>>, vector<1x8x128xf32>
    %22 = vector.shape_cast %21 : vector<1x8x128xf32> to vector<8x128xf32>
    %23 = arith.addf %22, %20 : vector<8x128xf32>
    %c0_22 = arith.constant 0 : index
    %c0_23 = arith.constant 0 : index
    %c0_24 = arith.constant 0 : index
    %24 = vector.load %arg12[%c0_22, %c0_23, %c0_24] : memref<8x8x128xf32, #tpu.memory_space<vmem>>, vector<1x8x128xf32>
    %25 = vector.shape_cast %24 : vector<1x8x128xf32> to vector<8x128xf32>
    %26 = vector.shape_cast %23 : vector<8x128xf32> to vector<1x8x128xf32>
    tpu.vector_store %arg12[%c0_22, %c0_23, %c0_24], %26 {strides = array<i32>} : memref<8x8x128xf32, #tpu.memory_space<vmem>>, vector<1x8x128xf32>,
    %27 = arith.subf %6, %14 : vector<8x128xf32>
    %28 = arith.mulf %27, %27 : vector<8x128xf32>
    %c1 = arith.constant 1 : index
    %c0_25 = arith.constant 0 : index
    %c0_26 = arith.constant 0 : index
    %29 = vector.load %arg12[%c1, %c0_25, %c0_26] : memref<8x8x128xf32, #tpu.memory_space<vmem>>, vector<1x8x128xf32>
    %30 = vector.shape_cast %29 : vector<1x8x128xf32> to vector<8x128xf32>
    %31 = arith.addf %30, %28 : vector<8x128xf32>
    %c1_27 = arith.constant 1 : index
    %c0_28 = arith.constant 0 : index
    %c0_29 = arith.constant 0 : index
    %32 = vector.load %arg12[%c1_27, %c0_28, %c0_29] : memref<8x8x128xf32, #tpu.memory_space<vmem>>, vector<1x8x128xf32>
    %33 = vector.shape_cast %32 : vector<1x8x128xf32> to vector<8x128xf32>
    %34 = vector.shape_cast %31 : vector<8x128xf32> to vector<1x8x128xf32>
    tpu.vector_store %arg12[%c1_27, %c0_28, %c0_29], %34 {strides = array<i32>} : memref<8x8x128xf32, #tpu.memory_space<vmem>>, vector<1x8x128xf32>,
    %35 = arith.subf %6, %16 : vector<8x128xf32>
    %36 = arith.mulf %35, %35 : vector<8x128xf32>
    %c2 = arith.constant 2 : index
    %c0_30 = arith.constant 0 : index
    %c0_31 = arith.constant 0 : index
    %37 = vector.load %arg12[%c2, %c0_30, %c0_31] : memref<8x8x128xf32, #tpu.memory_space<vmem>>, vector<1x8x128xf32>
    %38 = vector.shape_cast %37 : vector<1x8x128xf32> to vector<8x128xf32>
    %39 = arith.addf %38, %36 : vector<8x128xf32>
    %c2_32 = arith.constant 2 : index
    %c0_33 = arith.constant 0 : index
    %c0_34 = arith.constant 0 : index
    %40 = vector.load %arg12[%c2_32, %c0_33, %c0_34] : memref<8x8x128xf32, #tpu.memory_space<vmem>>, vector<1x8x128xf32>
    %41 = vector.shape_cast %40 : vector<1x8x128xf32> to vector<8x128xf32>
    %42 = vector.shape_cast %39 : vector<8x128xf32> to vector<1x8x128xf32>
    tpu.vector_store %arg12[%c2_32, %c0_33, %c0_34], %42 {strides = array<i32>} : memref<8x8x128xf32, #tpu.memory_space<vmem>>, vector<1x8x128xf32>,
    %43 = arith.subf %6, %18 : vector<8x128xf32>
    %44 = arith.mulf %43, %43 : vector<8x128xf32>
    %c3 = arith.constant 3 : index
    %c0_35 = arith.constant 0 : index
    %c0_36 = arith.constant 0 : index
    %45 = vector.load %arg12[%c3, %c0_35, %c0_36] : memref<8x8x128xf32, #tpu.memory_space<vmem>>, vector<1x8x128xf32>
    %46 = vector.shape_cast %45 : vector<1x8x128xf32> to vector<8x128xf32>
    %47 = arith.addf %46, %44 : vector<8x128xf32>
    %c3_37 = arith.constant 3 : index
    %c0_38 = arith.constant 0 : index
    %c0_39 = arith.constant 0 : index
    %48 = vector.load %arg12[%c3_37, %c0_38, %c0_39] : memref<8x8x128xf32, #tpu.memory_space<vmem>>, vector<1x8x128xf32>
    %49 = vector.shape_cast %48 : vector<1x8x128xf32> to vector<8x128xf32>
    %50 = vector.shape_cast %47 : vector<8x128xf32> to vector<1x8x128xf32>
    tpu.vector_store %arg12[%c3_37, %c0_38, %c0_39], %50 {strides = array<i32>} : memref<8x8x128xf32, #tpu.memory_space<vmem>>, vector<1x8x128xf32>,
    %51 = arith.subf %10, %12 : vector<8x128xf32>
    %52 = arith.mulf %51, %51 : vector<8x128xf32>
    %c4 = arith.constant 4 : index
    %c0_40 = arith.constant 0 : index
    %c0_41 = arith.constant 0 : index
    %53 = vector.load %arg12[%c4, %c0_40, %c0_41] : memref<8x8x128xf32, #tpu.memory_space<vmem>>, vector<1x8x128xf32>
    %54 = vector.shape_cast %53 : vector<1x8x128xf32> to vector<8x128xf32>
    %55 = arith.addf %54, %52 : vector<8x128xf32>
    %c4_42 = arith.constant 4 : index
    %c0_43 = arith.constant 0 : index
    %c0_44 = arith.constant 0 : index
    %56 = vector.load %arg12[%c4_42, %c0_43, %c0_44] : memref<8x8x128xf32, #tpu.memory_space<vmem>>, vector<1x8x128xf32>
    %57 = vector.shape_cast %56 : vector<1x8x128xf32> to vector<8x128xf32>
    %58 = vector.shape_cast %55 : vector<8x128xf32> to vector<1x8x128xf32>
    tpu.vector_store %arg12[%c4_42, %c0_43, %c0_44], %58 {strides = array<i32>} : memref<8x8x128xf32, #tpu.memory_space<vmem>>, vector<1x8x128xf32>,
    %59 = arith.subf %10, %14 : vector<8x128xf32>
    %60 = arith.mulf %59, %59 : vector<8x128xf32>
    %c5 = arith.constant 5 : index
    %c0_45 = arith.constant 0 : index
    %c0_46 = arith.constant 0 : index
    %61 = vector.load %arg12[%c5, %c0_45, %c0_46] : memref<8x8x128xf32, #tpu.memory_space<vmem>>, vector<1x8x128xf32>
    %62 = vector.shape_cast %61 : vector<1x8x128xf32> to vector<8x128xf32>
    %63 = arith.addf %62, %60 : vector<8x128xf32>
    %c5_47 = arith.constant 5 : index
    %c0_48 = arith.constant 0 : index
    %c0_49 = arith.constant 0 : index
    %64 = vector.load %arg12[%c5_47, %c0_48, %c0_49] : memref<8x8x128xf32, #tpu.memory_space<vmem>>, vector<1x8x128xf32>
    %65 = vector.shape_cast %64 : vector<1x8x128xf32> to vector<8x128xf32>
    %66 = vector.shape_cast %63 : vector<8x128xf32> to vector<1x8x128xf32>
    tpu.vector_store %arg12[%c5_47, %c0_48, %c0_49], %66 {strides = array<i32>} : memref<8x8x128xf32, #tpu.memory_space<vmem>>, vector<1x8x128xf32>,
    %67 = arith.subf %10, %16 : vector<8x128xf32>
    %68 = arith.mulf %67, %67 : vector<8x128xf32>
    %c6 = arith.constant 6 : index
    %c0_50 = arith.constant 0 : index
    %c0_51 = arith.constant 0 : index
    %69 = vector.load %arg12[%c6, %c0_50, %c0_51] : memref<8x8x128xf32, #tpu.memory_space<vmem>>, vector<1x8x128xf32>
    %70 = vector.shape_cast %69 : vector<1x8x128xf32> to vector<8x128xf32>
    %71 = arith.addf %70, %68 : vector<8x128xf32>
    %c6_52 = arith.constant 6 : index
    %c0_53 = arith.constant 0 : index
    %c0_54 = arith.constant 0 : index
    %72 = vector.load %arg12[%c6_52, %c0_53, %c0_54] : memref<8x8x128xf32, #tpu.memory_space<vmem>>, vector<1x8x128xf32>
    %73 = vector.shape_cast %72 : vector<1x8x128xf32> to vector<8x128xf32>
    %74 = vector.shape_cast %71 : vector<8x128xf32> to vector<1x8x128xf32>
    tpu.vector_store %arg12[%c6_52, %c0_53, %c0_54], %74 {strides = array<i32>} : memref<8x8x128xf32, #tpu.memory_space<vmem>>, vector<1x8x128xf32>,
    %75 = arith.subf %10, %18 : vector<8x128xf32>
    %76 = arith.mulf %75, %75 : vector<8x128xf32>
    %c7 = arith.constant 7 : index
    %c0_55 = arith.constant 0 : index
    %c0_56 = arith.constant 0 : index
    %77 = vector.load %arg12[%c7, %c0_55, %c0_56] : memref<8x8x128xf32, #tpu.memory_space<vmem>>, vector<1x8x128xf32>
    %78 = vector.shape_cast %77 : vector<1x8x128xf32> to vector<8x128xf32>
    %79 = arith.addf %78, %76 : vector<8x128xf32>
    %c7_57 = arith.constant 7 : index
    %c0_58 = arith.constant 0 : index
    %c0_59 = arith.constant 0 : index
    %80 = vector.load %arg12[%c7_57, %c0_58, %c0_59] : memref<8x8x128xf32, #tpu.memory_space<vmem>>, vector<1x8x128xf32>
    %81 = vector.shape_cast %80 : vector<1x8x128xf32> to vector<8x128xf32>
    %82 = vector.shape_cast %79 : vector<8x128xf32> to vector<1x8x128xf32>
    tpu.vector_store %arg12[%c7_57, %c0_58, %c0_59], %82 {strides = array<i32>} : memref<8x8x128xf32, #tpu.memory_space<vmem>>, vector<1x8x128xf32>,
    %c0_i32_60 = arith.constant 0 : i32
    %83 = arith.cmpi eq, %arg1, %c0_i32_60 : i32
    %84 = arith.extui %83 : i1 to i32
    %c0_i32_61 = arith.constant 0 : i32
    %85 = arith.cmpi ne, %84, %c0_i32_61 : i32
    scf.if %85 {
      %c0_62 = arith.constant 0 : index
      %c0_63 = arith.constant 0 : index
      %c0_64 = arith.constant 0 : index
      %86 = vector.load %arg12[%c0_62, %c0_63, %c0_64] : memref<8x8x128xf32, #tpu.memory_space<vmem>>, vector<8x8x128xf32>
      %cst_65 = arith.constant dense<0.000000e+00> : vector<8x8xf32>
      %87 = vector.multi_reduction <add>, %86, %cst_65 [2] : vector<8x8x128xf32> to vector<8x8xf32>
      %cst_66 = arith.constant dense<0.000000e+00> : vector<8xf32>
      %88 = vector.multi_reduction <add>, %87, %cst_66 [1] : vector<8x8xf32> to vector<8xf32>
      %89 = vector.shape_cast %88 : vector<8xf32> to vector<8x1xf32>
      %cst_67 = arith.constant 0.000000e+00 : f32
      %90 = vector.broadcast %cst_67 : f32 to vector<8x1xf32>
      %91 = arith.subf %89, %90 : vector<8x1xf32>
      %cst_68 = arith.constant 0.000000e+00 : f32
      %92 = vector.broadcast %cst_68 : f32 to vector<8x1xf32>
      %93 = arith.maximumf %91, %92 : vector<8x1xf32>
      %94 = math.sqrt %93 : vector<8x1xf32>
      %95 = vector.shape_cast %94 : vector<8x1xf32> to vector<1x8x1xf32>
      %c0_69 = arith.constant 0 : index
      %c0_70 = arith.constant 0 : index
      %c0_71 = arith.constant 0 : index
      %96 = vector.load %arg11[%c0_69, %c0_70, %c0_71] : memref<1x8x1xf32, #tpu.memory_space<vmem>>, vector<1x8x1xf32>
      tpu.vector_store %arg11[%c0_69, %c0_70, %c0_71], %95 {strides = array<i32>} : memref<1x8x1xf32, #tpu.memory_space<vmem>>, vector<1x8x1xf32>,
    } else {
    }
    return
  }
  func.func @transform_0(%arg0: i32, %arg1: i32, %arg2: memref<2xi32, #tpu.memory_space<smem>>, %arg3: memref<2xi32, #tpu.memory_space<smem>>, %arg4: memref<2xi32, #tpu.memory_space<smem>>) -> (i32, i32, i32) {
    %0 = arith.index_cast %arg0 : i32 to index
    %1 = memref.load %arg2[%0] : memref<2xi32, #tpu.memory_space<smem>>
    %c0_i32 = arith.constant 0 : i32
    %c0_i32_0 = arith.constant 0 : i32
    return %1, %arg1, %c0_i32 : i32, i32, i32
  }
  func.func @transform_1(%arg0: i32, %arg1: i32, %arg2: memref<2xi32, #tpu.memory_space<smem>>, %arg3: memref<2xi32, #tpu.memory_space<smem>>, %arg4: memref<2xi32, #tpu.memory_space<smem>>) -> (i32, i32, i32) {
    %0 = arith.index_cast %arg0 : i32 to index
    %1 = memref.load %arg2[%0] : memref<2xi32, #tpu.memory_space<smem>>
    %c0_i32 = arith.constant 0 : i32
    %c0_i32_0 = arith.constant 0 : i32
    return %1, %arg1, %c0_i32 : i32, i32, i32
  }
  func.func @transform_2(%arg0: i32, %arg1: i32, %arg2: memref<2xi32, #tpu.memory_space<smem>>, %arg3: memref<2xi32, #tpu.memory_space<smem>>, %arg4: memref<2xi32, #tpu.memory_space<smem>>) -> (i32, i32, i32) {
    %0 = arith.index_cast %arg0 : i32 to index
    %1 = memref.load %arg3[%0] : memref<2xi32, #tpu.memory_space<smem>>
    %c0_i32 = arith.constant 0 : i32
    %c0_i32_0 = arith.constant 0 : i32
    return %1, %arg1, %c0_i32 : i32, i32, i32
  }
  func.func @transform_3(%arg0: i32, %arg1: i32, %arg2: memref<2xi32, #tpu.memory_space<smem>>, %arg3: memref<2xi32, #tpu.memory_space<smem>>, %arg4: memref<2xi32, #tpu.memory_space<smem>>) -> (i32, i32, i32) {
    %0 = arith.index_cast %arg0 : i32 to index
    %1 = memref.load %arg3[%0] : memref<2xi32, #tpu.memory_space<smem>>
    %c0_i32 = arith.constant 0 : i32
    %c0_i32_0 = arith.constant 0 : i32
    return %1, %arg1, %c0_i32 : i32, i32, i32
  }
  func.func @transform_4(%arg0: i32, %arg1: i32, %arg2: memref<2xi32, #tpu.memory_space<smem>>, %arg3: memref<2xi32, #tpu.memory_space<smem>>, %arg4: memref<2xi32, #tpu.memory_space<smem>>) -> (i32, i32, i32) {
    %0 = arith.index_cast %arg0 : i32 to index
    %1 = memref.load %arg4[%0] : memref<2xi32, #tpu.memory_space<smem>>
    %c0_i32 = arith.constant 0 : i32
    %c0_i32_0 = arith.constant 0 : i32
    return %1, %arg1, %c0_i32 : i32, i32, i32
  }
  func.func @transform_5(%arg0: i32, %arg1: i32, %arg2: memref<2xi32, #tpu.memory_space<smem>>, %arg3: memref<2xi32, #tpu.memory_space<smem>>, %arg4: memref<2xi32, #tpu.memory_space<smem>>) -> (i32, i32, i32) {
    %0 = arith.index_cast %arg0 : i32 to index
    %1 = memref.load %arg4[%0] : memref<2xi32, #tpu.memory_space<smem>>
    %c0_i32 = arith.constant 0 : i32
    %c0_i32_0 = arith.constant 0 : i32
    return %1, %arg1, %c0_i32 : i32, i32, i32
  }
  func.func @transform_6(%arg0: i32, %arg1: i32, %arg2: memref<2xi32, #tpu.memory_space<smem>>, %arg3: memref<2xi32, #tpu.memory_space<smem>>, %arg4: memref<2xi32, #tpu.memory_space<smem>>) -> (i32, i32, i32) {
    %c0_i32 = arith.constant 0 : i32
    %c0_i32_0 = arith.constant 0 : i32
    %c0_i32_1 = arith.constant 0 : i32
    return %arg0, %c0_i32, %c0_i32_0 : i32, i32, i32
  }
}

</mosaic_0001>

<llo_original>
// kernel: tpu_custom_call.1
$region0: #{tpu_custom_call.1}
  #allocation0 [shape = 'u32[]', space=smem, size = 0x4, offset = 0x4, fixed_abs, tag = 'smem constant byte address 0x4 - core index']
  #allocation1 [shape = 'u32[144,128]{1,0:T(1,128)}', space=vmem, size = 0x12000, scoped, tag = 'internal scratch']
  #allocation2 [shape = 'f32[8,8,128]{2,1,0:T(8,128)}', space=vmem, size = 0x8000, scoped, tag = 'scratch operand']
  #allocation3 [shape = 's32[1]{0}', space=sflag, size = 0x4, scoped, tag = 'scoped memory for tpu_custom_call.1']
  #allocation4 [shape = 'u8[512]{0}', space=smem, size = 0x200, scoped, tag = 'prefetched SMEM operand 0']
  #allocation5 [shape = 'u8[512]{0}', space=smem, size = 0x200, scoped, tag = 'prefetched SMEM operand 1']
  #allocation6 [shape = 'u8[512]{0}', space=smem, size = 0x200, scoped, tag = 'prefetched SMEM operand 2']
  %s0 = inlined_call_operand.hbm [shape: s32[2], index: 0, kind: input, shape index: {}]
  %s1 = inlined_call_operand.vmem [shape: s32[2], index: 1, kind: input, shape index: {}]
  %s2 = inlined_call_operand.vmem [shape: s32[2], index: 2, kind: input, shape index: {}]
  %s3 = inlined_call_operand.hbm [shape: f32[4,8,128], index: 3, kind: input, shape index: {}]
  %s4 = inlined_call_operand.hbm [shape: f32[4,8,128], index: 4, kind: input, shape index: {}]
  %s5 = inlined_call_operand.hbm [shape: f32[4,8,128], index: 5, kind: input, shape index: {}]
  %s6 = inlined_call_operand.hbm [shape: f32[4,8,128], index: 6, kind: input, shape index: {}]
  %s7 = inlined_call_operand.hbm [shape: f32[4,8,128], index: 7, kind: input, shape index: {}]
  %s8 = inlined_call_operand.hbm [shape: f32[4,8,128], index: 8, kind: input, shape index: {}]
  %s9 = inlined_call_operand.vmem [shape: f32[2,8,1], index: 9, kind: output, shape index: {}]
  %s10 = sld [smem:[#allocation0]]
  $region89: #{tpu_custom_call.1} parent=0
    _
  %s12 = ssub.s32 1, %s10
  %s13 = scalar_select 0, %s12, %s10
  %15 = dma.hbm_to_smem %s0, 16, [#allocation4], [#allocation3]
  %s16 = sshll.u32 %s1, 4
  %s17 = int_to_ptr.vmem [resolvable:$true] %s16
  %19 = dma.vmem_to_smem %s17, 16, [#allocation5], [#allocation3]
  %s20 = sshll.u32 %s2, 4
  %s21 = int_to_ptr.vmem [resolvable:$true] %s20
  %23 = dma.vmem_to_smem %s21, 16, [#allocation6], [#allocation3]
  %24 = dma.done [#allocation3], 48
  %25 = sfence
  $region1: #{tpu_custom_call.1} parent=0
    #allocation7 [shape = 'u8[8192]{0}', space=vmem, size = 0x2000, scoped, tag = 'input window, operand 3']
    #allocation8 [shape = 's32[2]{0}', space=sflag, size = 0x8, scoped, tag = 'scoped memory for tpu_custom_call.1']
    #allocation9 [shape = 'u8[8192]{0}', space=vmem, size = 0x2000, scoped, tag = 'input window, operand 4']
    #allocation10 [shape = 's32[2]{0}', space=sflag, size = 0x8, scoped, tag = 'scoped memory for tpu_custom_call.1']
    #allocation11 [shape = 'u8[8192]{0}', space=vmem, size = 0x2000, scoped, tag = 'input window, operand 5']
    #allocation12 [shape = 'u8[8192]{0}', space=vmem, size = 0x2000, scoped, tag = 'input window, operand 6']
    #allocation13 [shape = 's32[2]{0}', space=sflag, size = 0x8, scoped, tag = 'scoped memory for tpu_custom_call.1']
    #allocation14 [shape = 'u8[8192]{0}', space=vmem, size = 0x2000, scoped, tag = 'input window, operand 7']
    #allocation15 [shape = 'u8[8192]{0}', space=vmem, size = 0x2000, scoped, tag = 'input window, operand 8']
    #allocation16 [shape = 's32[2]{0}', space=sflag, size = 0x8, scoped, tag = 'scoped memory for tpu_custom_call.1']
    %26 = vsyncpa [#allocation8], 0
    %s27 = scalar_lea.sflag [#allocation8], 1
    %28 = vsyncpa %s27, 0
    %29 = vsyncpa [#allocation10], 0
    %s30 = scalar_lea.sflag [#allocation10], 1
    %31 = vsyncpa %s30, 0
    %32 = vsyncpa [#allocation13], 0
    %s33 = scalar_lea.sflag [#allocation13], 1
    %34 = vsyncpa %s33, 0
    %35 = vsyncpa [#allocation16], 0
    %s36 = scalar_lea.sflag [#allocation16], 1
    %37 = vsyncpa %s36, 0
    loop: start=0, step=1, limit=4
    $region2: #{tpu_custom_call.1} parent=1 // loop_pre_header
      _
    $region3: #{tpu_custom_call.1} parent=1 // loop_header
      %s39 = sphi 0, %s43
      %p40 = scmp.ge.s32.totalorder %s39, 4
      %s46 = sphi 0, %s58
      %s47 = sphi 0, %s54
      %s48 = sphi 0, %s46
      %s49 = sphi 0, %s47
      %s50 = sphi 0, %s48
      %s51 = sphi 0, %s49
      %s65 = sphi 0, %s67
      %s68 = sphi 0, %s65
      %s69 = sphi 0, %s68
      %s85 = sphi 0, %s69
      %s95 = sphi 0, %s97
      %s98 = sphi 0, %s95
      %s99 = sphi 0, %s98
      %s115 = sphi 0, %s99
      %s125 = sphi 0, %s127
      %s128 = sphi 0, %s125
      %s129 = sphi 0, %s128
      %s145 = sphi 0, %s129
      %s155 = sphi 0, %s157
      %s158 = sphi 0, %s155
      %s159 = sphi 0, %s158
      %s175 = sphi 0, %s159
      %s185 = sphi 0, %s187
      %s188 = sphi 0, %s185
      %s189 = sphi 0, %s188
      %s205 = sphi 0, %s189
      %s215 = sphi 0, %s217
      %s218 = sphi 0, %s215
      %s219 = sphi 0, %s218
      %s235 = sphi 0, %s219
      %s241 = sphi 0, %s243
      %s244 = sphi 0, %s241
      %s245 = sphi 0, %s244
      %s261 = sphi 0, %s245
    $region4: #{tpu_custom_call.1} parent=1 // loop_header_branch
      %42 = sbr.rel (%p40) target = $region8
    $region5: #{tpu_custom_call.1} parent=1 // loop_body
      %s44 = ssub.s32 %s39, 1
      %s45 = ssub.s32 %s39, 2
      %s52 = sadd.s32 1, %s47
      %p53 = scmp.ge.s32.totalorder %s52, 1
      %s54 = scalar_select %p53, 0, %s52
      %s55 = sadd.s32 1, %s46
      %s56 = scalar_select %p53, %s55, %s46
      %p57 = scmp.ge.s32.totalorder %s56, 2
      %s58 = scalar_select %p57, 0, %s56
      %s59 = sld [smem:[#allocation4 + %s46]]
      %s60 = sld [smem:[#allocation4 + %s58]]
      %s61 = ssub.s32 %s59, %s60
      %s62 = ssub.s32 %s47, %s54
      %s63 = sor.u32 %s61, %s62
      %p64 = scmp.eq.s32.totalorder %s63, 0
      %s66 = sadd.s32 %s65, 1
      %s67 = scalar_select %p64, %s65, %s66
      %p70 = pneg %p64
      %p71 = scmp.eq.s32.totalorder %s39, 1
      %p72 = por %p70, %p71
      %p73 = scmp.ne.s32.totalorder %s65, %s68
      %p74 = scmp.eq.s32.totalorder %s39, 0
      %p75 = por %p73, %p74
      %p76 = scmp.ne.s32.totalorder %s65, %s68
      %p77 = scmp.eq.s32.totalorder %s44, 1
      %p78 = por %p76, %p77
      %p79 = scmp.ne.s32.totalorder %s68, %s69
      %p80 = scmp.eq.s32.totalorder %s44, 0
      %p81 = por %p79, %p80
      %p82 = scmp.ne.s32.totalorder %s68, %s69
      %p83 = scmp.eq.s32.totalorder %s45, 1
      %p84 = por %p82, %p83
      %p86 = scmp.ne.s32.totalorder %s69, %s85
      %p87 = scmp.eq.s32.totalorder %s45, 0
      %p88 = por %p86, %p87
      %s89 = sld [smem:[#allocation4 + %s46]]
      %s90 = sld [smem:[#allocation4 + %s58]]
      %s91 = ssub.s32 %s89, %s90
      %s92 = ssub.s32 %s47, %s54
      %s93 = sor.u32 %s91, %s92
      %p94 = scmp.eq.s32.totalorder %s93, 0
      %s96 = sadd.s32 %s95, 1
      %s97 = scalar_select %p94, %s95, %s96
      %p100 = pneg %p94
      %p101 = scmp.eq.s32.totalorder %s39, 1
      %p102 = por %p100, %p101
      %p103 = scmp.ne.s32.totalorder %s95, %s98
      %p104 = scmp.eq.s32.totalorder %s39, 0
      %p105 = por %p103, %p104
      %p106 = scmp.ne.s32.totalorder %s95, %s98
      %p107 = scmp.eq.s32.totalorder %s44, 1
      %p108 = por %p106, %p107
      %p109 = scmp.ne.s32.totalorder %s98, %s99
      %p110 = scmp.eq.s32.totalorder %s44, 0
      %p111 = por %p109, %p110
      %p112 = scmp.ne.s32.totalorder %s98, %s99
      %p113 = scmp.eq.s32.totalorder %s45, 1
      %p114 = por %p112, %p113
      %p116 = scmp.ne.s32.totalorder %s99, %s115
      %p117 = scmp.eq.s32.totalorder %s45, 0
      %p118 = por %p116, %p117
      %s119 = sld [smem:[#allocation5 + %s46]]
      %s120 = sld [smem:[#allocation5 + %s58]]
      %s121 = ssub.s32 %s119, %s120
      %s122 = ssub.s32 %s47, %s54
      %s123 = sor.u32 %s121, %s122
      %p124 = scmp.eq.s32.totalorder %s123, 0
      %s126 = sadd.s32 %s125, 1
      %s127 = scalar_select %p124, %s125, %s126
      %p130 = pneg %p124
      %p131 = scmp.eq.s32.totalorder %s39, 1
      %p132 = por %p130, %p131
      %p133 = scmp.ne.s32.totalorder %s125, %s128
      %p134 = scmp.eq.s32.totalorder %s39, 0
      %p135 = por %p133, %p134
      %p136 = scmp.ne.s32.totalorder %s125, %s128
      %p137 = scmp.eq.s32.totalorder %s44, 1
      %p138 = por %p136, %p137
      %p139 = scmp.ne.s32.totalorder %s128, %s129
      %p140 = scmp.eq.s32.totalorder %s44, 0
      %p141 = por %p139, %p140
      %p142 = scmp.ne.s32.totalorder %s128, %s129
      %p143 = scmp.eq.s32.totalorder %s45, 1
      %p144 = por %p142, %p143
      %p146 = scmp.ne.s32.totalorder %s129, %s145
      %p147 = scmp.eq.s32.totalorder %s45, 0
      %p148 = por %p146, %p147
      %s149 = sld [smem:[#allocation5 + %s46]]
      %s150 = sld [smem:[#allocation5 + %s58]]
      %s151 = ssub.s32 %s149, %s150
      %s152 = ssub.s32 %s47, %s54
      %s153 = sor.u32 %s151, %s152
      %p154 = scmp.eq.s32.totalorder %s153, 0
      %s156 = sadd.s32 %s155, 1
      %s157 = scalar_select %p154, %s155, %s156
      %p160 = pneg %p154
      %p161 = scmp.eq.s32.totalorder %s39, 1
      %p162 = por %p160, %p161
      %p163 = scmp.ne.s32.totalorder %s155, %s158
      %p164 = scmp.eq.s32.totalorder %s39, 0
      %p165 = por %p163, %p164
      %p166 = scmp.ne.s32.totalorder %s155, %s158
      %p167 = scmp.eq.s32.totalorder %s44, 1
      %p168 = por %p166, %p167
      %p169 = scmp.ne.s32.totalorder %s158, %s159
      %p170 = scmp.eq.s32.totalorder %s44, 0
      %p171 = por %p169, %p170
      %p172 = scmp.ne.s32.totalorder %s158, %s159
      %p173 = scmp.eq.s32.totalorder %s45, 1
      %p174 = por %p172, %p173
      %p176 = scmp.ne.s32.totalorder %s159, %s175
      %p177 = scmp.eq.s32.totalorder %s45, 0
      %p178 = por %p176, %p177
      %s179 = sld [smem:[#allocation6 + %s46]]
      %s180 = sld [smem:[#allocation6 + %s58]]
      %s181 = ssub.s32 %s179, %s180
      %s182 = ssub.s32 %s47, %s54
      %s183 = sor.u32 %s181, %s182
      %p184 = scmp.eq.s32.totalorder %s183, 0
      %s186 = sadd.s32 %s185, 1
      %s187 = scalar_select %p184, %s185, %s186
      %p190 = pneg %p184
      %p191 = scmp.eq.s32.totalorder %s39, 1
      %p192 = por %p190, %p191
      %p193 = scmp.ne.s32.totalorder %s185, %s188
      %p194 = scmp.eq.s32.totalorder %s39, 0
      %p195 = por %p193, %p194
      %p196 = scmp.ne.s32.totalorder %s185, %s188
      %p197 = scmp.eq.s32.totalorder %s44, 1
      %p198 = por %p196, %p197
      %p199 = scmp.ne.s32.totalorder %s188, %s189
      %p200 = scmp.eq.s32.totalorder %s44, 0
      %p201 = por %p199, %p200
      %p202 = scmp.ne.s32.totalorder %s188, %s189
      %p203 = scmp.eq.s32.totalorder %s45, 1
      %p204 = por %p202, %p203
      %p206 = scmp.ne.s32.totalorder %s189, %s205
      %p207 = scmp.eq.s32.totalorder %s45, 0
      %p208 = por %p206, %p207
      %s209 = sld [smem:[#allocation6 + %s46]]
      %s210 = sld [smem:[#allocation6 + %s58]]
      %s211 = ssub.s32 %s209, %s210
      %s212 = ssub.s32 %s47, %s54
      %s213 = sor.u32 %s211, %s212
      %p214 = scmp.eq.s32.totalorder %s213, 0
      %s216 = sadd.s32 %s215, 1
      %s217 = scalar_select %p214, %s215, %s216
      %p220 = pneg %p214
      %p221 = scmp.eq.s32.totalorder %s39, 1
      %p222 = por %p220, %p221
      %p223 = scmp.ne.s32.totalorder %s215, %s218
      %p224 = scmp.eq.s32.totalorder %s39, 0
      %p225 = por %p223, %p224
      %p226 = scmp.ne.s32.totalorder %s215, %s218
      %p227 = scmp.eq.s32.totalorder %s44, 1
      %p228 = por %p226, %p227
      %p229 = scmp.ne.s32.totalorder %s218, %s219
      %p230 = scmp.eq.s32.totalorder %s44, 0
      %p231 = por %p229, %p230
      %p232 = scmp.ne.s32.totalorder %s218, %s219
      %p233 = scmp.eq.s32.totalorder %s45, 1
      %p234 = por %p232, %p233
      %p236 = scmp.ne.s32.totalorder %s219, %s235
      %p237 = scmp.eq.s32.totalorder %s45, 0
      %p238 = por %p236, %p237
      %s239 = ssub.s32 %s46, %s58
      %p240 = scmp.eq.s32.totalorder %s239, 0
      %s242 = sadd.s32 %s241, 1
      %s243 = scalar_select %p240, %s241, %s242
      %p246 = pneg %p240
      %p247 = scmp.eq.s32.totalorder %s39, 1
      %p248 = por %p246, %p247
      %p249 = scmp.ne.s32.totalorder %s241, %s244
      %p250 = scmp.eq.s32.totalorder %s39, 0
      %p251 = por %p249, %p250
      %p252 = scmp.ne.s32.totalorder %s241, %s244
      %p253 = scmp.eq.s32.totalorder %s44, 1
      %p254 = por %p252, %p253
      %p255 = scmp.ne.s32.totalorder %s244, %s245
      %p256 = scmp.eq.s32.totalorder %s44, 0
      %p257 = por %p255, %p256
      %p258 = scmp.ne.s32.totalorder %s244, %s245
      %p259 = scmp.eq.s32.totalorder %s45, 1
      %p260 = por %p258, %p259
      %p262 = scmp.ne.s32.totalorder %s245, %s261
      %p263 = scmp.eq.s32.totalorder %s45, 0
      %p264 = por %p262, %p263
      %p265 = scmp.le.s32.totalorder 1, %s39
      %p266 = scmp.lt.s32.totalorder %s39, 3
      %p267 = pnand %p265, %p266
      %p268 = pneg %p267
      // Predicated region
      $region9: #{tpu_custom_call.1} parent=5 // pred_check
        _
      $region10: #{tpu_custom_call.1} parent=5 // pred_check_branch
        %270 = sbr.rel (%p267) target = $region12
      $region11: #{tpu_custom_call.1} parent=5 // pred_region
        %s271 = ssub.s32 %s39, 1
      $region12: #{tpu_custom_call.1} parent=5 // pred_fallthru
        _
      %p272 = scmp.lt.s32.totalorder %s39, 2
      // Predicated region
      $region13: #{tpu_custom_call.1} parent=5 // pred_check
        %p273 = pneg %p272
      $region14: #{tpu_custom_call.1} parent=5 // pred_check_branch
        %275 = sbr.rel (%p273) target = $region16
      $region15: #{tpu_custom_call.1} parent=5 // pred_region
        // Predicated region
        $region17: #{tpu_custom_call.1} parent=15 // pred_check
          %p276 = pneg %p75
        $region18: #{tpu_custom_call.1} parent=15 // pred_check_branch
          %278 = sbr.rel (%p276) target = $region20
        $region19: #{tpu_custom_call.1} parent=15 // pred_region
          %s279 = sand.u32 %s65, 1
          %s280 = scalar_lea.sflag [#allocation8], %s279
          %s281 = sand.u32 %s65, 1
          %s282 = smul.addr %s281, 8
          %s283 = scalar_lea.vmem [#allocation7], %s282
          %s284 = sld [smem:[#allocation4 + %s46]]
          %s286 = ssub.s32 128, 128
          %287 = vsyncadd %s280, %s286
          %s288 = sadd.s32 %s47, %s284
          %s289 = smul.addr %s288, 128
          %s290 = scalar_lea.hbm %s3, %s289
          %s292 = sshll.u32 %s283, 4
          %s293 = int_to_ptr.vmem [resolvable:$true] %s292
          %295 = dma.hbm_to_vmem [thread:$0]  %s290, 128, %s293, %s280
        $region20: #{tpu_custom_call.1} parent=15 // pred_fallthru
          _
        // Predicated region
        $region21: #{tpu_custom_call.1} parent=15 // pred_check
          %p296 = pneg %p105
        $region22: #{tpu_custom_call.1} parent=15 // pred_check_branch
          %298 = sbr.rel (%p296) target = $region24
        $region23: #{tpu_custom_call.1} parent=15 // pred_region
          %s299 = sand.u32 %s39, 1
          %s300 = scalar_lea.sflag [#allocation10], %s299
          %s301 = sand.u32 %s95, 1
          %s302 = smul.addr %s301, 8
          %s303 = scalar_lea.vmem [#allocation9], %s302
          %s304 = sld [smem:[#allocation4 + %s46]]
          %s306 = ssub.s32 128, 128
          %307 = vsyncadd %s300, %s306
          %s308 = sadd.s32 %s47, %s304
          %s309 = smul.addr %s308, 128
          %s310 = scalar_lea.hbm %s4, %s309
          %s312 = sshll.u32 %s303, 4
          %s313 = int_to_ptr.vmem [resolvable:$true] %s312
          %315 = dma.hbm_to_vmem [thread:$0]  %s310, 128, %s313, %s300
        $region24: #{tpu_custom_call.1} parent=15 // pred_fallthru
          _
        // Predicated region
        $region25: #{tpu_custom_call.1} parent=15 // pred_check
          %p316 = pneg %p135
        $region26: #{tpu_custom_call.1} parent=15 // pred_check_branch
          %318 = sbr.rel (%p316) target = $region28
        $region27: #{tpu_custom_call.1} parent=15 // pred_region
          %s319 = sand.u32 %s39, 1
          %s320 = scalar_lea.sflag [#allocation10], %s319
          %s321 = sand.u32 %s125, 1
          %s322 = smul.addr %s321, 8
          %s323 = scalar_lea.vmem [#allocation11], %s322
          %s324 = sld [smem:[#allocation5 + %s46]]
          %s326 = ssub.s32 128, 128
          %327 = vsyncadd %s320, %s326
          %s328 = sadd.s32 %s47, %s324
          %s329 = smul.addr %s328, 128
          %s330 = scalar_lea.hbm %s5, %s329
          %s332 = sshll.u32 %s323, 4
          %s333 = int_to_ptr.vmem [resolvable:$true] %s332
          %335 = dma.hbm_to_vmem [thread:$0]  %s330, 128, %s333, %s320
        $region28: #{tpu_custom_call.1} parent=15 // pred_fallthru
          _
        // Predicated region
        $region29: #{tpu_custom_call.1} parent=15 // pred_check
          %p336 = pneg %p165
        $region30: #{tpu_custom_call.1} parent=15 // pred_check_branch
          %338 = sbr.rel (%p336) target = $region32
        $region31: #{tpu_custom_call.1} parent=15 // pred_region
          %s339 = sand.u32 %s39, 1
          %s340 = scalar_lea.sflag [#allocation13], %s339
          %s341 = sand.u32 %s155, 1
          %s342 = smul.addr %s341, 8
          %s343 = scalar_lea.vmem [#allocation12], %s342
          %s344 = sld [smem:[#allocation5 + %s46]]
          %s346 = ssub.s32 128, 128
          %347 = vsyncadd %s340, %s346
          %s348 = sadd.s32 %s47, %s344
          %s349 = smul.addr %s348, 128
          %s350 = scalar_lea.hbm %s6, %s349
          %s352 = sshll.u32 %s343, 4
          %s353 = int_to_ptr.vmem [resolvable:$true] %s352
          %355 = dma.hbm_to_vmem [thread:$0]  %s350, 128, %s353, %s340
        $region32: #{tpu_custom_call.1} parent=15 // pred_fallthru
          _
        // Predicated region
        $region33: #{tpu_custom_call.1} parent=15 // pred_check
          %p356 = pneg %p195
        $region34: #{tpu_custom_call.1} parent=15 // pred_check_branch
          %358 = sbr.rel (%p356) target = $region36
        $region35: #{tpu_custom_call.1} parent=15 // pred_region
          %s359 = sand.u32 %s39, 1
          %s360 = scalar_lea.sflag [#allocation13], %s359
          %s361 = sand.u32 %s185, 1
          %s362 = smul.addr %s361, 8
          %s363 = scalar_lea.vmem [#allocation14], %s362
          %s364 = sld [smem:[#allocation6 + %s46]]
          %s366 = ssub.s32 128, 128
          %367 = vsyncadd %s360, %s366
          %s368 = sadd.s32 %s47, %s364
          %s369 = smul.addr %s368, 128
          %s370 = scalar_lea.hbm %s7, %s369
          %s372 = sshll.u32 %s363, 4
          %s373 = int_to_ptr.vmem [resolvable:$true] %s372
          %375 = dma.hbm_to_vmem [thread:$0]  %s370, 128, %s373, %s360
        $region36: #{tpu_custom_call.1} parent=15 // pred_fallthru
          _
        // Predicated region
        $region37: #{tpu_custom_call.1} parent=15 // pred_check
          %p376 = pneg %p225
        $region38: #{tpu_custom_call.1} parent=15 // pred_check_branch
          %378 = sbr.rel (%p376) target = $region40
        $region39: #{tpu_custom_call.1} parent=15 // pred_region
          %s379 = sand.u32 %s215, 1
          %s380 = scalar_lea.sflag [#allocation16], %s379
          %s381 = sand.u32 %s215, 1
          %s382 = smul.addr %s381, 8
          %s383 = scalar_lea.vmem [#allocation15], %s382
          %s384 = sld [smem:[#allocation6 + %s46]]
          %s386 = ssub.s32 128, 128
          %387 = vsyncadd %s380, %s386
          %s388 = sadd.s32 %s47, %s384
          %s389 = smul.addr %s388, 128
          %s390 = scalar_lea.hbm %s8, %s389
          %s392 = sshll.u32 %s383, 4
          %s393 = int_to_ptr.vmem [resolvable:$true] %s392
          %395 = dma.hbm_to_vmem [thread:$0]  %s390, 128, %s393, %s380
        $region40: #{tpu_custom_call.1} parent=15 // pred_fallthru
          _
      $region16: #{tpu_custom_call.1} parent=5 // pred_fallthru
        _
      %p396 = scmp.le.s32.totalorder 1, %s39
      %p397 = scmp.lt.s32.totalorder %s39, 3
      %p398 = pnand %p396, %p397
      %p399 = pneg %p398
      // Predicated region
      $region41: #{tpu_custom_call.1} parent=5 // pred_check
        _
      $region42: #{tpu_custom_call.1} parent=5 // pred_check_branch
        %401 = sbr.rel (%p398) target = $region44
      $region43: #{tpu_custom_call.1} parent=5 // pred_region
        %s402 = ssub.s32 %s39, 1
        %s403 = sand.u32 %s68, 1
        %s404 = scalar_lea.sflag [#allocation8], %s403
        %s405 = sand.u32 %s68, 1
        %s406 = smul.addr %s405, 8
        %s407 = scalar_lea.vmem [#allocation7], %s406
        // Predicated region
        $region45: #{tpu_custom_call.1} parent=43 // pred_check
          %p408 = pneg %p81
        $region46: #{tpu_custom_call.1} parent=43 // pred_check_branch
          %410 = sbr.rel (%p408) target = $region48
        $region47: #{tpu_custom_call.1} parent=43 // pred_region
          %411 = dma.done %s404, 128
        $region48: #{tpu_custom_call.1} parent=43 // pred_fallthru
          _
        %s412 = sand.u32 %s44, 1
        %s413 = scalar_lea.sflag [#allocation10], %s412
        %s414 = sand.u32 %s98, 1
        %s415 = smul.addr %s414, 8
        %s416 = scalar_lea.vmem [#allocation9], %s415
        // Predicated region
        $region49: #{tpu_custom_call.1} parent=43 // pred_check
          %p417 = pneg %p111
        $region50: #{tpu_custom_call.1} parent=43 // pred_check_branch
          %419 = sbr.rel (%p417) target = $region52
        $region51: #{tpu_custom_call.1} parent=43 // pred_region
          %420 = dma.done %s413, 128
        $region52: #{tpu_custom_call.1} parent=43 // pred_fallthru
          _
        %s421 = sand.u32 %s44, 1
        %s422 = scalar_lea.sflag [#allocation10], %s421
        %s423 = sand.u32 %s128, 1
        %s424 = smul.addr %s423, 8
        %s425 = scalar_lea.vmem [#allocation11], %s424
        // Predicated region
        $region53: #{tpu_custom_call.1} parent=43 // pred_check
          %p426 = pneg %p141
        $region54: #{tpu_custom_call.1} parent=43 // pred_check_branch
          %428 = sbr.rel (%p426) target = $region56
        $region55: #{tpu_custom_call.1} parent=43 // pred_region
          %429 = dma.done %s422, 128
        $region56: #{tpu_custom_call.1} parent=43 // pred_fallthru
          _
        %s430 = sand.u32 %s44, 1
        %s431 = scalar_lea.sflag [#allocation13], %s430
        %s432 = sand.u32 %s158, 1
        %s433 = smul.addr %s432, 8
        %s434 = scalar_lea.vmem [#allocation12], %s433
        // Predicated region
        $region57: #{tpu_custom_call.1} parent=43 // pred_check
          %p435 = pneg %p171
        $region58: #{tpu_custom_call.1} parent=43 // pred_check_branch
          %437 = sbr.rel (%p435) target = $region60
        $region59: #{tpu_custom_call.1} parent=43 // pred_region
          %438 = dma.done %s431, 128
        $region60: #{tpu_custom_call.1} parent=43 // pred_fallthru
          _
        %s439 = sand.u32 %s44, 1
        %s440 = scalar_lea.sflag [#allocation13], %s439
        %s441 = sand.u32 %s188, 1
        %s442 = smul.addr %s441, 8
        %s443 = scalar_lea.vmem [#allocation14], %s442
        // Predicated region
        $region61: #{tpu_custom_call.1} parent=43 // pred_check
          %p444 = pneg %p201
        $region62: #{tpu_custom_call.1} parent=43 // pred_check_branch
          %446 = sbr.rel (%p444) target = $region64
        $region63: #{tpu_custom_call.1} parent=43 // pred_region
          %447 = dma.done %s440, 128
        $region64: #{tpu_custom_call.1} parent=43 // pred_fallthru
          _
        %s448 = sand.u32 %s218, 1
        %s449 = scalar_lea.sflag [#allocation16], %s448
        %s450 = sand.u32 %s218, 1
        %s451 = smul.addr %s450, 8
        %s452 = scalar_lea.vmem [#allocation15], %s451
        // Predicated region
        $region65: #{tpu_custom_call.1} parent=43 // pred_check
          %p453 = pneg %p231
        $region66: #{tpu_custom_call.1} parent=43 // pred_check_branch
          %455 = sbr.rel (%p453) target = $region68
        $region67: #{tpu_custom_call.1} parent=43 // pred_region
          %456 = dma.done %s449, 128
        $region68: #{tpu_custom_call.1} parent=43 // pred_fallthru
          _
        %s457 = sand.u32 %s68, 1
        %s458 = scalar_lea.sflag [#allocation8], %s457
        %s459 = sand.u32 %s68, 1
        %s460 = smul.addr %s459, 8
        %s461 = scalar_lea.vmem [#allocation7], %s460
        %p462 = pneg %p81
        %p463 = pneg %p78
        %s464 = sand.u32 %s44, 1
        %s465 = scalar_lea.sflag [#allocation10], %s464
        %s466 = sand.u32 %s98, 1
        %s467 = smul.addr %s466, 8
        %s468 = scalar_lea.vmem [#allocation9], %s467
        %p469 = pneg %p111
        %p470 = pneg %p108
        %s471 = sand.u32 %s44, 1
        %s472 = scalar_lea.sflag [#allocation10], %s471
        %s473 = sand.u32 %s128, 1
        %s474 = smul.addr %s473, 8
        %s475 = scalar_lea.vmem [#allocation11], %s474
        %p476 = pneg %p141
        %p477 = pneg %p138
        %s478 = sand.u32 %s44, 1
        %s479 = scalar_lea.sflag [#allocation13], %s478
        %s480 = sand.u32 %s158, 1
        %s481 = smul.addr %s480, 8
        %s482 = scalar_lea.vmem [#allocation12], %s481
        %p483 = pneg %p171
        %p484 = pneg %p168
        %s485 = sand.u32 %s44, 1
        %s486 = scalar_lea.sflag [#allocation13], %s485
        %s487 = sand.u32 %s188, 1
        %s488 = smul.addr %s487, 8
        %s489 = scalar_lea.vmem [#allocation14], %s488
        %p490 = pneg %p201
        %p491 = pneg %p198
        %s492 = sand.u32 %s218, 1
        %s493 = scalar_lea.sflag [#allocation16], %s492
        %s494 = sand.u32 %s218, 1
        %s495 = smul.addr %s494, 8
        %s496 = scalar_lea.vmem [#allocation15], %s495
        %p497 = pneg %p231
        %p498 = pneg %p228
        %p499 = pneg %p257
        %p500 = pneg %p254
        %p501 = scmp.lt.s32.totalorder %s48, 1
        %s502 = scalar_select %p501, %s48, 1
        %s503 = smul.addr %s502, 8
        %s504 = scalar_lea.vmem %s9, %s503
        %s505 = sld [smem:[#allocation4 + %s48]]
        %s506 = sld [smem:[#allocation4 + %s48]]
        %s507 = sld [smem:[#allocation5 + %s48]]
        %s508 = sld [smem:[#allocation5 + %s48]]
        %s509 = sld [smem:[#allocation6 + %s48]]
        %s510 = sld [smem:[#allocation6 + %s48]]
        %p511 = scmp.lt.s32.totalorder %s48, 1
        %s512 = scalar_select %p511, %s48, 1
        %s513 = smul.addr %s512, 8
        %s514 = scalar_lea.vmem %s9, %s513
        %p515 = scmp.eq.s32.totalorder %s49, 0
        // Predicated region
        $region69: #{tpu_custom_call.1} parent=43 // pred_check
          %p516 = pneg %p515
        $region70: #{tpu_custom_call.1} parent=43 // pred_check_branch
          %518 = sbr.rel (%p516) target = $region72
        $region71: #{tpu_custom_call.1} parent=43 // pred_region
          %519 = vst [vmem:[#allocation2] sm:$0xff] 0.0
          %520 = vst [vmem:[#allocation2 + $0x8] sm:$0xff] 0.0
          %521 = vst [vmem:[#allocation2 + $0x10] sm:$0xff] 0.0
          %522 = vst [vmem:[#allocation2 + $0x18] sm:$0xff] 0.0
          %523 = vst [vmem:[#allocation2 + $0x20] sm:$0xff] 0.0
          %524 = vst [vmem:[#allocation2 + $0x28] sm:$0xff] 0.0
          %525 = vst [vmem:[#allocation2 + $0x30] sm:$0xff] 0.0
          %526 = vst [vmem:[#allocation2 + $0x38] sm:$0xff] 0.0
        $region72: #{tpu_custom_call.1} parent=43 // pred_fallthru
          _
        %v527 = vld [vmem:[%s407] sm:$0xff]
        %v528 = vadd.f32 %v527, 1e-06
        %v529 = vld [vmem:[%s416] sm:$0xff]
        %v530 = vadd.f32 %v529, 1e-06
        %v531 = vld [vmem:[%s425] sm:$0xff]
        %v532 = vld [vmem:[%s434] sm:$0xff]
        %v533 = vld [vmem:[%s443] sm:$0xff]
        %v534 = vld [vmem:[%s452] sm:$0xff]
        %v535 = vsub.f32 %v528, %v531
        %v536 = vmul.f32 %v535, %v535
        %v537 = vld [vmem:[#allocation2] sm:$0xff]
        %v538 = vadd.f32 %v537, %v536
        %539 = vst [vmem:[#allocation2] sm:$0xff] %v538
        %v540 = vsub.f32 %v528, %v532
        %v541 = vmul.f32 %v540, %v540
        %s542 = scalar_lea.vmem [#allocation2], 8
        %v543 = vld [vmem:[%s542] sm:$0xff]
        %v544 = vadd.f32 %v543, %v541
        %545 = vst [vmem:[%s542] sm:$0xff] %v544
        %v546 = vsub.f32 %v528, %v533
        %v547 = vmul.f32 %v546, %v546
        %s548 = scalar_lea.vmem [#allocation2], 16
        %v549 = vld [vmem:[%s548] sm:$0xff]
        %v550 = vadd.f32 %v549, %v547
        %551 = vst [vmem:[%s548] sm:$0xff] %v550
        %v552 = vsub.f32 %v528, %v534
        %v553 = vmul.f32 %v552, %v552
        %s554 = scalar_lea.vmem [#allocation2], 24
        %v555 = vld [vmem:[%s554] sm:$0xff]
        %v556 = vadd.f32 %v555, %v553
        %557 = vst [vmem:[%s554] sm:$0xff] %v556
        %v558 = vsub.f32 %v530, %v531
        %v559 = vmul.f32 %v558, %v558
        %s560 = scalar_lea.vmem [#allocation2], 32
        %v561 = vld [vmem:[%s560] sm:$0xff]
        %v562 = vadd.f32 %v561, %v559
        %563 = vst [vmem:[%s560] sm:$0xff] %v562
        %v564 = vsub.f32 %v530, %v532
        %v565 = vmul.f32 %v564, %v564
        %s566 = scalar_lea.vmem [#allocation2], 40
        %v567 = vld [vmem:[%s566] sm:$0xff]
        %v568 = vadd.f32 %v567, %v565
        %569 = vst [vmem:[%s566] sm:$0xff] %v568
        %v570 = vsub.f32 %v530, %v533
        %v571 = vmul.f32 %v570, %v570
        %s572 = scalar_lea.vmem [#allocation2], 48
        %v573 = vld [vmem:[%s572] sm:$0xff]
        %v574 = vadd.f32 %v573, %v571
        %575 = vst [vmem:[%s572] sm:$0xff] %v574
        %v576 = vsub.f32 %v530, %v534
        %v577 = vmul.f32 %v576, %v576
        %s578 = scalar_lea.vmem [#allocation2], 56
        %v579 = vld [vmem:[%s578] sm:$0xff]
        %v580 = vadd.f32 %v579, %v577
        %581 = vst [vmem:[%s578] sm:$0xff] %v580
        // Predicated region
        $region73: #{tpu_custom_call.1} parent=43 // pred_check
          %p582 = pneg %p515
        $region74: #{tpu_custom_call.1} parent=43 // pred_check_branch
          %584 = sbr.rel (%p582) target = $region76
        $region75: #{tpu_custom_call.1} parent=43 // pred_region
          %v585 = vld [vmem:[#allocation2] sm:$0xff]
          %v586 = vld [vmem:[#allocation2 + $0x8] sm:$0xff]
          %v587 = vld [vmem:[#allocation2 + $0x10] sm:$0xff]
          %v588 = vld [vmem:[#allocation2 + $0x18] sm:$0xff]
          %v589 = vld [vmem:[#allocation2 + $0x20] sm:$0xff]
          %v590 = vld [vmem:[#allocation2 + $0x28] sm:$0xff]
          %v591 = vld [vmem:[#allocation2 + $0x30] sm:$0xff]
          %v592 = vld [vmem:[#allocation2 + $0x38] sm:$0xff]
          %593 = vadd.xlane.f32.xlu0 %v585
          %v594 = vpop.xlane.xlu0 %593
          %595 = vadd.xlane.f32.xlu0 %v586
          %v596 = vpop.xlane.xlu0 %595
          %597 = vadd.xlane.f32.xlu0 %v587
          %v598 = vpop.xlane.xlu0 %597
          %599 = vadd.xlane.f32.xlu0 %v588
          %v600 = vpop.xlane.xlu0 %599
          %601 = vadd.xlane.f32.xlu0 %v589
          %v602 = vpop.xlane.xlu0 %601
          %603 = vadd.xlane.f32.xlu0 %v590
          %v604 = vpop.xlane.xlu0 %603
          %605 = vadd.xlane.f32.xlu0 %v591
          %v606 = vpop.xlane.xlu0 %605
          %607 = vadd.xlane.f32.xlu0 %v592
          %v608 = vpop.xlane.xlu0 %607
          %v617 = vlaneseq
          %v618 = vand.u32 %v617, 127
          %v619 = vlaneseq
          %v620 = vshrl.u32 %v619, 7
          %v621 = vsub.s32 %v618, %v620
          %v622 = vrot.slane %v594, %v621
          %v623 = vlaneseq
          %v624 = vshrl.u32 %v623, 7
          %v625 = vsub.s32 %v618, %v624
          %v626 = vrot.slane %v596, %v625
          %v627 = vlaneseq
          %v628 = vshrl.u32 %v627, 7
          %v629 = vsub.s32 %v618, %v628
          %v630 = vrot.slane %v598, %v629
          %v631 = vlaneseq
          %v632 = vshrl.u32 %v631, 7
          %v633 = vsub.s32 %v618, %v632
          %v634 = vrot.slane %v600, %v633
          %v635 = vlaneseq
          %v636 = vshrl.u32 %v635, 7
          %v637 = vsub.s32 %v618, %v636
          %v638 = vrot.slane %v602, %v637
          %v639 = vlaneseq
          %v640 = vshrl.u32 %v639, 7
          %v641 = vsub.s32 %v618, %v640
          %v642 = vrot.slane %v604, %v641
          %v643 = vlaneseq
          %v644 = vshrl.u32 %v643, 7
          %v645 = vsub.s32 %v618, %v644
          %v646 = vrot.slane %v606, %v645
          %v647 = vlaneseq
          %v648 = vshrl.u32 %v647, 7
          %v649 = vsub.s32 %v618, %v648
          %v650 = vrot.slane %v608, %v649
          %vm651 = vcmask 1041409
          %v652 = vsel %vm651, %v626, %v622
          %vm653 = vcmask 1042434
          %v654 = vsel %vm653, %v630, %v652
          %vm655 = vcmask 1043459
          %v656 = vsel %vm655, %v634, %v654
          %vm657 = vcmask 1044484
          %v658 = vsel %vm657, %v638, %v656
          %vm659 = vcmask 1045509
          %v660 = vsel %vm659, %v642, %v658
          %vm661 = vcmask 1046534
          %v662 = vsel %vm661, %v646, %v660
          %vm663 = vcmask 1047559
          %v664 = vsel %vm663, %v650, %v662
          %vm666 = vcmask 64512
          %v667 = vsel %vm666, %v664, 0.0
          %668 = vadd.xlane.f32.xlu0 %v667
          %v669 = vpop.xlane.xlu0 %668
          %v670 = vmax.f32 %v669, 0.0
          %v671 = vrsqrt.pop %v670
          %v672 = vmul.f32 %v670, %v671
          %vm673 = vcmp.eq.f32.partialorder %v670, inf
          %v674 = vsel %vm673, %v670, %v672
          %vm675 = vcmp.eq.f32.partialorder %v670, 0.0
          %v676 = vand.u32 %v670, 2147483648
          %v677 = vsel %vm675, %v676, %v674
          %vm678 = vcmask 7168
          %679 = vst.msk [vmem:[%s514] sm:$0xff] %vm678, %v677
        $region76: #{tpu_custom_call.1} parent=43 // pred_fallthru
          _
        %p680 = scmp.lt.s32.totalorder %s48, 1
        %s681 = scalar_select %p680, %s48, 1
        %s682 = smul.addr %s681, 8
        %s683 = scalar_lea.vmem %s9, %s682
        // Predicated region
        $region77: #{tpu_custom_call.1} parent=43 // pred_check
          %p684 = pneg %p254
        $region78: #{tpu_custom_call.1} parent=43 // pred_check_branch
          %686 = sbr.rel (%p684) target = $region80
        $region79: #{tpu_custom_call.1} parent=43 // pred_region
          _
        $region80: #{tpu_custom_call.1} parent=43 // pred_fallthru
          _
      $region44: #{tpu_custom_call.1} parent=5 // pred_fallthru
        _
      %p687 = scmp.le.s32.totalorder 2, %s39
      // Predicated region
      $region81: #{tpu_custom_call.1} parent=5 // pred_check
        %p688 = pneg %p687
      $region82: #{tpu_custom_call.1} parent=5 // pred_check_branch
        %690 = sbr.rel (%p688) target = $region84
      $region83: #{tpu_custom_call.1} parent=5 // pred_region
        %s691 = ssub.s32 %s39, 2
        // Predicated region
        $region85: #{tpu_custom_call.1} parent=83 // pred_check
          %p692 = pneg %p260
        $region86: #{tpu_custom_call.1} parent=83 // pred_check_branch
          %694 = sbr.rel (%p692) target = $region88
        $region87: #{tpu_custom_call.1} parent=83 // pred_region
          %p695 = scmp.lt.s32.totalorder %s50, 1
          %s696 = scalar_select %p695, %s50, 1
          %s697 = smul.addr %s696, 8
          %s698 = scalar_lea.vmem %s9, %s697
        $region88: #{tpu_custom_call.1} parent=83 // pred_fallthru
          _
      $region84: #{tpu_custom_call.1} parent=5 // pred_fallthru
        _
    $region6: #{tpu_custom_call.1} parent=1 // loop_footer
      %s43 = sadd.s32 1, %s39
    $region7: #{tpu_custom_call.1} parent=1 // loop_footer_branch
      %38 = sbr.rel target = $region3
    $region8: #{tpu_custom_call.1} parent=1 // loop_exit
      _
    %699 = vsyncpa [#allocation8], 1
    %s700 = scalar_lea.sflag [#allocation8], 1
    %701 = vsyncpa %s700, 1
    %702 = vsyncpa [#allocation10], 1
    %s703 = scalar_lea.sflag [#allocation10], 1
    %704 = vsyncpa %s703, 1
    %705 = vsyncpa [#allocation13], 1
    %s706 = scalar_lea.sflag [#allocation13], 1
    %707 = vsyncpa %s706, 1
    %708 = vsyncpa [#allocation16], 1
    %s709 = scalar_lea.sflag [#allocation16], 1
    %710 = vsyncpa %s709, 1

</llo_original>
